<compile_context>
chip_gen: v6e
topology: v6e:2x2x1
jax: 0.10.0
libtpu: 0.0.40
codegen_flags: <defaults>
</compile_context>

<pallas_src>
import jax
import jax.numpy as jnp
from jax.experimental import pallas as pl
from jax.experimental.pallas import tpu as pltpu


def _round_up(x, m):
    return ((x + m - 1) // m) * m


def _pad_axis(a, axis, target):
    if a.shape[axis] == target:
        return a
    widths = [(0, 0)] * a.ndim
    widths[axis] = (0, target - a.shape[axis])
    return jnp.pad(a, widths)


# ---------------------------------------------------------------------------
# One-time parameter preparation (NOT per forward call): transpose to
# (in, hid) / (hid, out), zero-pad hid/out to lane-dense multiples of 128, and
# optionally cast the weight matrices to bf16 (native MXU input dtype).
# Zero padding is numerically exact; biases stay f32.
# ---------------------------------------------------------------------------
def prepare_neck_params(w1, b1, w2, b2, *, param_dtype=None):
    hid, in_feat = w1.shape
    out_ch, hid2 = w2.shape
    assert hid2 == hid, "w2 in_features must equal w1 out_features"
    hid_pad = _round_up(hid, 128)
    out_pad = _round_up(out_ch, 128)
    w1_t = _pad_axis(jnp.transpose(w1), 1, hid_pad)                        # (in_feat, hid_pad)
    w2_t = _pad_axis(_pad_axis(jnp.transpose(w2), 0, hid_pad), 1, out_pad)  # (hid_pad, out_pad)
    if param_dtype is not None:
        w1_t = w1_t.astype(param_dtype)
        w2_t = w2_t.astype(param_dtype)
    b1_2d = _pad_axis(b1.reshape(1, hid), 1, hid_pad).astype(jnp.float32)
    b2_2d = _pad_axis(b2.reshape(1, out_ch), 1, out_pad).astype(jnp.float32)
    return dict(w1=w1_t, b1=b1_2d, w2=w2_t, b2=b2_2d,
                in_features=in_feat, hid=hid, out=out_ch)


# ---------------------------------------------------------------------------
# Kernels
# ---------------------------------------------------------------------------
def _finalize(acc, b1_ref, w2_ref, b2_ref, o_ref):
    # fc1 bias + ReLU, then fc2 + bias; acc is the f32 partial of pooled @ w1.
    h = jnp.maximum(acc + b1_ref[...], 0.0)
    out = jnp.dot(h.astype(w2_ref.dtype), w2_ref[...],
                  preferred_element_type=jnp.float32)
    o_ref[...] = (out + b2_ref[...]).astype(o_ref.dtype)


def _neck_pool_kernel(x_ref, w1_ref, b1_ref, w2_ref, b2_ref, o_ref, acc_ref):
    # x_ref: (tn, tc, HW) -- NCHW view, no transpose.  Grid = (batch tiles, C tiles).
    c = pl.program_id(1)

    @pl.when(c == 0)
    def _init():
        acc_ref[...] = jnp.zeros_like(acc_ref)

    # AdaptiveAvgPool2d((1,1)) == mean over the spatial (lane) axis.  The upcast to f32
    # is folded into the reduction, so a bf16 x tile never spawns an f32 copy.
    pooled = jnp.mean(x_ref[...], axis=2, dtype=jnp.float32)          # (tn, tc)
    acc_ref[...] += jnp.dot(pooled.astype(w1_ref.dtype), w1_ref[...],
                            preferred_element_type=jnp.float32)

    @pl.when(c == pl.num_programs(1) - 1)
    def _fin():
        _finalize(acc_ref[...], b1_ref, w2_ref, b2_ref, o_ref)


def _neck_flat_kernel(x_ref, w1_ref, b1_ref, w2_ref, b2_ref, o_ref, acc_ref):
    # x_ref: (tn, tk) slice of the flattened (N, C*H*W) features (x.view(N, -1) path).
    k = pl.program_id(1)

    @pl.when(k == 0)
    def _init():
        acc_ref[...] = jnp.zeros_like(acc_ref)

    acc_ref[...] += jnp.dot(x_ref[...].astype(w1_ref.dtype), w1_ref[...],
                            preferred_element_type=jnp.float32)

    @pl.when(k == pl.num_programs(1) - 1)
    def _fin():
        _finalize(acc_ref[...], b1_ref, w2_ref, b2_ref, o_ref)


# ---------------------------------------------------------------------------
# Tiling / budgeting helpers
# ---------------------------------------------------------------------------
def _vmem_budget():
    # Per-chip VMEM: v5e/v6e 128 MiB, v7x 64 MiB.  Derive the scoped limit and the
    # planning budget from the actual capacity instead of hard-coding 48 MiB.
    try:
        capacity = int(pltpu.get_tpu_info().vmem_capacity_bytes)
    except Exception:                       # interpret mode / older runtime
        capacity = 64 * 1024 * 1024
    vmem_limit = min(int(capacity * 0.75), 110 * 1024 * 1024)
    work_budget = int(vmem_limit * 0.80)
    return vmem_limit, work_budget


def _pick_reduce_tile(total, *, multiple, max_tile):
    """Largest tile t <= max_tile with t % multiple == 0 and total % t == 0.
    Returns (tile, padded_total); falls back to zero-padding `total` (exact)."""
    if total <= max_tile:
        return total, total
    t = (max_tile // multiple) * multiple
    while t >= multiple:
        if total % t == 0:
            return t, total
        t -= multiple
    t = max(multiple, (max_tile // multiple) * multiple)
    return t, _round_up(total, t)


def _pick_batch_tile(n, per_tn_bytes, budget_bytes, min_steps=2):
    """Largest batch tile dividing n (multiple of 8, or n itself) within budget.
    Prefers >= min_steps grid steps when possible (v7x megacore / pipelining)."""
    cands = sorted({d for d in range(8, n + 1, 8) if n % d == 0} | {n})
    fitting = [t for t in cands if t * per_tn_bytes <= budget_bytes] or [cands[0]]
    tn = max(fitting)
    multi = [t for t in fitting if n // t >= min_steps]
    if multi:
        tn = max(multi)
    return tn


# ---------------------------------------------------------------------------
# Forward
# ---------------------------------------------------------------------------
def nonlinear_neck_v1(x_nchw, params, *, with_avg_pool=True, x_dtype=None):
    """MoCo-v2 neck forward. Returns [out] with out.shape == (N, out_channels).

    x_nchw : (N, C, H, W) activations (no layout change is performed on them).
    params : dict from prepare_neck_params (transposed / 128-padded / optional bf16).
    """
    N, C, H, W = x_nchw.shape
    w1_t, b1_2d, w2_t, b2_2d = params["w1"], params["b1"], params["w2"], params["b2"]
    in_feat, out_ch = params["in_features"], params["out"]
    hid_pad, out_pad = w1_t.shape[1], w2_t.shape[1]
    out_dtype = x_nchw.dtype

    if x_dtype is not None and x_dtype != x_nchw.dtype:
        # TODO(synk): in a full model, fuse this cast into the producing backbone op
        # instead of a standalone XLA convert.
        x_nchw = x_nchw.astype(x_dtype)
    x_bytes = jnp.dtype(x_nchw.dtype).itemsize
    w_bytes = jnp.dtype(w1_t.dtype).itemsize
    out_bytes = jnp.dtype(out_dtype).itemsize

    vmem_limit, budget = _vmem_budget()
    const_resident = 2 * hid_pad * out_pad * w_bytes + 2 * (hid_pad + out_pad) * 4

    if with_avg_pool:
        assert in_feat == C, "fc1 in_features must equal C when with_avg_pool=True"
        hw = H * W
        x_feat = x_nchw.reshape(N, C, hw)                 # free reshape, no transpose
        # Channel (reduction) tile: double-buffered w1 tiles get <= budget/4.
        max_tc = max(8, (budget // 4) // max(1, 2 * hid_pad * w_bytes))
        tc, c_pad = _pick_reduce_tile(C, multiple=8, max_tile=max_tc)
        if c_pad != C:
            x_feat = _pad_axis(x_feat, 1, c_pad)          # fallback only (awkward C)
        if w1_t.shape[0] != c_pad:
            w1_t = _pad_axis(w1_t, 0, c_pad)
        # Batch tile: x tiles are double-buffered; HW sits on lanes (VMEM pads to 128,
        # HBM DMA only moves the real columns).
        hw_lanes = _round_up(hw, 128)
        tc_sub = _round_up(min(tc, c_pad), 8)
        per_tn = (2 * tc_sub * hw_lanes * x_bytes         # x double buffer
                  + hid_pad * 4                           # f32 accumulator scratch
                  + 2 * out_pad * out_bytes)              # out double buffer
        resident = 2 * tc * hid_pad * w_bytes + const_resident
        tn = _pick_batch_tile(N, per_tn, max(per_tn, budget - resident))
        grid = (N // tn, c_pad // tc)
        in_specs = [
            pl.BlockSpec((tn, tc, hw), lambda i, c: (i, c, 0)),
            pl.BlockSpec((tc, hid_pad), lambda i, c: (c, 0)),
            pl.BlockSpec((1, hid_pad), lambda i, c: (0, 0)),
            pl.BlockSpec((hid_pad, out_pad), lambda i, c: (0, 0)),
            pl.BlockSpec((1, out_pad), lambda i, c: (0, 0)),
        ]
        kernel = _neck_pool_kernel
        flops = 2 * N * c_pad * hid_pad + 2 * N * hid_pad * out_pad + N * c_pad * hw
    else:
        K = C * H * W
        assert in_feat == K, "fc1 in_features must equal C*H*W when with_avg_pool=False"
        x_feat = x_nchw.reshape(N, K)                     # free reshape
        max_tk = max(128, (budget // 4) // max(1, 2 * hid_pad * w_bytes))
        tk, k_pad = _pick_reduce_tile(K, multiple=128, max_tile=max_tk)
        if k_pad != K:
            x_feat = _pad_axis(x_feat, 1, k_pad)
        if w1_t.shape[0] != k_pad:
            w1_t = _pad_axis(w1_t, 0, k_pad)
        per_tn = 2 * tk * x_bytes + hid_pad * 4 + 2 * out_pad * out_bytes
        resident = 2 * tk * hid_pad * w_bytes + const_resident
        tn = _pick_batch_tile(N, per_tn, max(per_tn, budget - resident))
        grid = (N // tn, k_pad // tk)
        in_specs = [
            pl.BlockSpec((tn, tk), lambda i, k: (i, k)),
            pl.BlockSpec((tk, hid_pad), lambda i, k: (k, 0)),
            pl.BlockSpec((1, hid_pad), lambda i, k: (0, 0)),
            pl.BlockSpec((hid_pad, out_pad), lambda i, k: (0, 0)),
            pl.BlockSpec((1, out_pad), lambda i, k: (0, 0)),
        ]
        kernel = _neck_flat_kernel
        flops = 2 * N * k_pad * hid_pad + 2 * N * hid_pad * out_pad

    out_specs = pl.BlockSpec((tn, out_pad), lambda i, r: (i, 0))
    scratch = [pltpu.VMEM((tn, hid_pad), jnp.float32)]

    bytes_accessed = int(
        x_feat.size * x_bytes
        + (N // tn) * w1_t.size * w_bytes                 # w1 streamed per batch tile
        + w2_t.size * w_bytes
        + b1_2d.size * 4 + b2_2d.size * 4
        + N * out_pad * out_bytes)
    cost = pl.CostEstimate(flops=flops, transcendentals=0,
                           bytes_accessed=bytes_accessed)

    out_padded = pl.pallas_call(
        kernel,
        out_shape=jax.ShapeDtypeStruct((N, out_pad), out_dtype),
        grid=grid,
        in_specs=in_specs,
        out_specs=out_specs,
        scratch_shapes=scratch,
        compiler_params=pltpu.CompilerParams(
            dimension_semantics=("parallel", "arbitrary"),
            vmem_limit_bytes=vmem_limit,
        ),
        cost_estimate=cost,
    )(x_feat, w1_t, b1_2d, w2_t, b2_2d)

    # Slice off lane padding of the output channels; return a list like the module.
    return [out_padded[:, :out_ch]]


# ---------------------------------------------------------------------------
# Reference + self-test
# ---------------------------------------------------------------------------
def _reference(x_nchw, w1, b1, w2, b2, with_avg_pool=True):
    if with_avg_pool:
        feat = jnp.mean(x_nchw, axis=(2, 3))
    else:
        feat = x_nchw.reshape(x_nchw.shape[0], -1)
    hp = jax.lax.Precision.HIGHEST
    h = jnp.maximum(jnp.dot(feat, w1.T, precision=hp) + b1, 0.0)
    return jnp.dot(h, w2.T, precision=hp) + b2


if __name__ == "__main__":
    # Small shapes consistent with the module.
    N, C, H, W = 2, 4, 16, 16          # in_channels = 4
    hid_channels, out_channels = 32, 16

    key = jax.random.PRNGKey(0)
    kx, k1, k2, k3 = jax.random.split(key, 4)

    x = jax.random.normal(kx, (N, C, H, W), dtype=jnp.float32)

    # normal_init(m, std=0.01): weights ~ N(0, 0.01), biases = 0
    w1 = 0.01 * jax.random.normal(k1, (hid_channels, C), dtype=jnp.float32)
    b1 = jnp.zeros((hid_channels,), dtype=jnp.float32)
    w2 = 0.01 * jax.random.normal(k2, (out_channels, hid_channels), dtype=jnp.float32)
    b2 = jnp.zeros((out_channels,), dtype=jnp.float32)

    # --- with_avg_pool=True (default MoCo-v2 neck), f32 params for tight numerics ---
    params = prepare_neck_params(w1, b1, w2, b2, param_dtype=jnp.float32)
    out = nonlinear_neck_v1(x, params, with_avg_pool=True)
    result = jax.block_until_ready(out[0])
    ref = _reference(x, w1, b1, w2, b2, with_avg_pool=True)
    assert result.shape == (N, out_channels)
    assert jnp.allclose(result, ref, atol=1e-5, rtol=1e-5)

    # --- production config: bf16 activations + bf16 weights (f32 accumulation) ---
    params_bf16 = prepare_neck_params(w1, b1, w2, b2, param_dtype=jnp.bfloat16)
    out_bf16 = nonlinear_neck_v1(x, params_bf16, with_avg_pool=True,
                                 x_dtype=jnp.bfloat16)
    result_bf16 = jax.block_until_ready(out_bf16[0]).astype(jnp.float32)
    assert result_bf16.shape == (N, out_channels)
    assert jnp.allclose(result_bf16, ref, atol=2e-2, rtol=2e-2)

    # --- with_avg_pool=False path (fc1 takes C*H*W features), K-tiled accumulation ---
    w1_flat = 0.01 * jax.random.normal(k3, (hid_channels, C * H * W), dtype=jnp.float32)
    params_flat = prepare_neck_params(w1_flat, b1, w2, b2, param_dtype=jnp.float32)
    out_f = nonlinear_neck_v1(x, params_flat, with_avg_pool=False)
    result_f = jax.block_until_ready(out_f[0])
    ref_f = _reference(x, w1_flat, b1, w2, b2, with_avg_pool=False)
    assert result_f.shape == (N, out_channels)
    assert jnp.allclose(result_f, ref_f, atol=1e-4, rtol=1e-4)

    print("KERNEL_OK")
</pallas_src>

<mosaic_0001>
module attributes {stable_mosaic.version = 11 : i64} {
  func.func @_neck_pool_kernel(%arg0: i32, %arg1: i32, %arg2: memref<2x4x256xf32, #tpu.memory_space<vmem>>, %arg3: memref<4x128xf32, #tpu.memory_space<vmem>>, %arg4: memref<1x128xf32, #tpu.memory_space<vmem>>, %arg5: memref<128x128xf32, #tpu.memory_space<vmem>>, %arg6: memref<1x128xf32, #tpu.memory_space<vmem>>, %arg7: memref<2x128xf32, #tpu.memory_space<vmem>>, %arg8: memref<2x128xf32, #tpu.memory_space<vmem>>) attributes {dimension_semantics = [#tpu.dimension_semantics<parallel>, #tpu.dimension_semantics<arbitrary>], iteration_bounds = array<i64: 1, 1>, scalar_prefetch = 0 : i64, scratch_operands = 1 : i64, tpu.core_type = #tpu.core_type<tc>, window_params = [{transform_indices = @transform_0, window_bounds = array<i64: 2, 4, 256>}, {transform_indices = @transform_1, window_bounds = array<i64: 4, 128>}, {pipeline_mode = #tpu.pipeline_mode<synchronous>, transform_indices = @transform_2, window_bounds = array<i64: 1, 128>}, {pipeline_mode = #tpu.pipeline_mode<synchronous>, transform_indices = @transform_3, window_bounds = array<i64: 128, 128>}, {pipeline_mode = #tpu.pipeline_mode<synchronous>, transform_indices = @transform_4, window_bounds = array<i64: 1, 128>}, {transform_indices = @transform_5, window_bounds = array<i64: 2, 128>}]} {
    %c0_i32 = arith.constant 0 : i32
    %0 = arith.cmpi eq, %arg1, %c0_i32 : i32
    %1 = arith.extui %0 : i1 to i32
    %c0_i32_0 = arith.constant 0 : i32
    %2 = arith.cmpi ne, %1, %c0_i32_0 : i32
    scf.if %2 {
      %cst_13 = arith.constant 0.000000e+00 : f32
      %15 = vector.broadcast %cst_13 : f32 to vector<2x128xf32>
      %c0_14 = arith.constant 0 : index
      %c0_15 = arith.constant 0 : index
      %16 = vector.load %arg8[%c0_14, %c0_15] : memref<2x128xf32, #tpu.memory_space<vmem>>, vector<2x128xf32>
      tpu.vector_store %arg8[%c0_14, %c0_15], %15 {strides = array<i32>} : memref<2x128xf32, #tpu.memory_space<vmem>>, vector<2x128xf32>,
    } else {
    }
    %c0 = arith.constant 0 : index
    %c0_1 = arith.constant 0 : index
    %c0_2 = arith.constant 0 : index
    %3 = vector.load %arg2[%c0, %c0_1, %c0_2] : memref<2x4x256xf32, #tpu.memory_space<vmem>>, vector<2x4x256xf32>
    %cst = arith.constant dense<0.000000e+00> : vector<2x4xf32>
    %4 = vector.multi_reduction <add>, %3, %cst [2] : vector<2x4x256xf32> to vector<2x4xf32>
    %cst_3 = arith.constant 2.560000e+02 : f32
    %5 = vector.broadcast %cst_3 : f32 to vector<2x4xf32>
    %6 = arith.divf %4, %5 : vector<2x4xf32>
    %c0_4 = arith.constant 0 : index
    %c0_5 = arith.constant 0 : index
    %7 = vector.load %arg8[%c0_4, %c0_5] : memref<2x128xf32, #tpu.memory_space<vmem>>, vector<2x128xf32>
    %c0_6 = arith.constant 0 : index
    %c0_7 = arith.constant 0 : index
    %8 = vector.load %arg3[%c0_6, %c0_7] : memref<4x128xf32, #tpu.memory_space<vmem>>, vector<4x128xf32>
    %cst_8 = arith.constant dense<0.000000e+00> : vector<2x128xf32>
    %9 = tpu.matmul %6, %8, %cst_8 {dimension_numbers = #tpu.dot_dimension_numbers<[1], [0], [0], [1], [0, 0, 1, 1], [], []>} : vector<2x4xf32>, vector<4x128xf32>, vector<2x128xf32> -> vector<2x128xf32>
    %10 = arith.addf %7, %9 : vector<2x128xf32>
    %c0_9 = arith.constant 0 : index
    %c0_10 = arith.constant 0 : index
    %11 = vector.load %arg8[%c0_9, %c0_10] : memref<2x128xf32, #tpu.memory_space<vmem>>, vector<2x128xf32>
    tpu.vector_store %arg8[%c0_9, %c0_10], %10 {strides = array<i32>} : memref<2x128xf32, #tpu.memory_space<vmem>>, vector<2x128xf32>,
    %c0_i32_11 = arith.constant 0 : i32
    %12 = arith.cmpi eq, %arg1, %c0_i32_11 : i32
    %13 = arith.extui %12 : i1 to i32
    %c0_i32_12 = arith.constant 0 : i32
    %14 = arith.cmpi ne, %13, %c0_i32_12 : i32
    scf.if %14 {
      %c0_13 = arith.constant 0 : index
      %c0_14 = arith.constant 0 : index
      %15 = vector.load %arg8[%c0_13, %c0_14] : memref<2x128xf32, #tpu.memory_space<vmem>>, vector<2x128xf32>
      %c0_15 = arith.constant 0 : index
      %c0_16 = arith.constant 0 : index
      %16 = vector.load %arg4[%c0_15, %c0_16] : memref<1x128xf32, #tpu.memory_space<vmem>>, vector<1x128xf32>
      %17 = vector.broadcast %16 : vector<1x128xf32> to vector<2x128xf32>
      %18 = arith.addf %15, %17 : vector<2x128xf32>
      %cst_17 = arith.constant 0.000000e+00 : f32
      %19 = vector.broadcast %cst_17 : f32 to vector<2x128xf32>
      %20 = arith.maximumf %18, %19 : vector<2x128xf32>
      %c0_18 = arith.constant 0 : index
      %c0_19 = arith.constant 0 : index
      %21 = vector.load %arg5[%c0_18, %c0_19] : memref<128x128xf32, #tpu.memory_space<vmem>>, vector<128x128xf32>
      %cst_20 = arith.constant dense<0.000000e+00> : vector<2x128xf32>
      %22 = tpu.matmul %20, %21, %cst_20 {dimension_numbers = #tpu.dot_dimension_numbers<[1], [0], [0], [1], [0, 0, 1, 1], [], []>} : vector<2x128xf32>, vector<128x128xf32>, vector<2x128xf32> -> vector<2x128xf32>
      %c0_21 = arith.constant 0 : index
      %c0_22 = arith.constant 0 : index
      %23 = vector.load %arg6[%c0_21, %c0_22] : memref<1x128xf32, #tpu.memory_space<vmem>>, vector<1x128xf32>
      %24 = vector.broadcast %23 : vector<1x128xf32> to vector<2x128xf32>
      %25 = arith.addf %22, %24 : vector<2x128xf32>
      %c0_23 = arith.constant 0 : index
      %c0_24 = arith.constant 0 : index
      %26 = vector.load %arg7[%c0_23, %c0_24] : memref<2x128xf32, #tpu.memory_space<vmem>>, vector<2x128xf32>
      tpu.vector_store %arg7[%c0_23, %c0_24], %25 {strides = array<i32>} : memref<2x128xf32, #tpu.memory_space<vmem>>, vector<2x128xf32>,
    } else {
    }
    return
  }
  func.func @transform_0(%arg0: i32, %arg1: i32) -> (i32, i32, i32) {
    %c0_i32 = arith.constant 0 : i32
    %c0_i32_0 = arith.constant 0 : i32
    return %arg0, %arg1, %c0_i32 : i32, i32, i32
  }
  func.func @transform_1(%arg0: i32, %arg1: i32) -> (i32, i32) {
    %c0_i32 = arith.constant 0 : i32
    %c0_i32_0 = arith.constant 0 : i32
    return %arg1, %c0_i32 : i32, i32
  }
  func.func @transform_2(%arg0: i32, %arg1: i32) -> (i32, i32) {
    %c0_i32 = arith.constant 0 : i32
    %c0_i32_0 = arith.constant 0 : i32
    %c0_i32_1 = arith.constant 0 : i32
    return %c0_i32, %c0_i32_0 : i32, i32
  }
  func.func @transform_3(%arg0: i32, %arg1: i32) -> (i32, i32) {
    %c0_i32 = arith.constant 0 : i32
    %c0_i32_0 = arith.constant 0 : i32
    %c0_i32_1 = arith.constant 0 : i32
    return %c0_i32, %c0_i32_0 : i32, i32
  }
  func.func @transform_4(%arg0: i32, %arg1: i32) -> (i32, i32) {
    %c0_i32 = arith.constant 0 : i32
    %c0_i32_0 = arith.constant 0 : i32
    %c0_i32_1 = arith.constant 0 : i32
    return %c0_i32, %c0_i32_0 : i32, i32
  }
  func.func @transform_5(%arg0: i32, %arg1: i32) -> (i32, i32) {
    %c0_i32 = arith.constant 0 : i32
    %c0_i32_0 = arith.constant 0 : i32
    return %arg0, %c0_i32 : i32, i32
  }
}

</mosaic_0001>

<llo_original>
// kernel: tpu_custom_call.1
$region0: #{tpu_custom_call.1}
  #allocation0 [shape = 'u32[]', space=smem, size = 0x4, offset = 0x4, fixed_abs, tag = 'smem constant byte address 0x4 - core index']
  #allocation1 [shape = 'u32[144,128]{1,0:T(1,128)}', space=vmem, size = 0x12000, scoped, tag = 'internal scratch']
  #allocation2 [shape = 'f32[2,128]{1,0:T(2,128)}', space=vmem, size = 0x400, scoped, tag = 'scratch operand']
  %s0 = inlined_call_operand.hbm [shape: f32[2,4,256], index: 0, kind: input, shape index: {}]
  %s1 = inlined_call_operand.hbm [shape: f32[4,128], index: 1, kind: input, shape index: {}]
  %s2 = inlined_call_operand.vmem [shape: f32[1,128], index: 2, kind: input, shape index: {}]
  %s3 = inlined_call_operand.hbm [shape: f32[128,128], index: 3, kind: input, shape index: {}]
  %s4 = inlined_call_operand.vmem [shape: f32[1,128], index: 4, kind: input, shape index: {}]
  %s5 = inlined_call_operand.hbm [shape: f32[2,128], index: 5, kind: output, shape index: {}]
  %s6 = sld [smem:[#allocation0]]
  $region50: #{tpu_custom_call.1} parent=0
    _
  %s8 = ssub.s32 1, %s6
  %s9 = scalar_select 0, %s8, %s6
  $region1: #{tpu_custom_call.1} parent=0
    #allocation3 [shape = 'u8[8192]{0}', space=vmem, size = 0x2000, scoped, tag = 'input window, operand 0, single buffered']
    #allocation4 [shape = 's32[1]{0}', space=sflag, size = 0x4, scoped, tag = 'scoped memory for tpu_custom_call.1']
    #allocation5 [shape = 's32[1]{0}', space=sflag, size = 0x4, scoped, tag = 'scoped memory for tpu_custom_call.1']
    #allocation6 [shape = 'u8[2048]{0}', space=vmem, size = 0x800, scoped, tag = 'input window, operand 1, single buffered']
    #allocation7 [shape = 's32[1]{0}', space=sflag, size = 0x4, scoped, tag = 'scoped memory for tpu_custom_call.1']
    #allocation8 [shape = 'u8[65536]{0}', space=vmem, size = 0x10000, scoped, tag = 'input window, operand 3, single buffered']
    #allocation9 [shape = 'u8[1024]{0}', space=vmem, size = 0x400, scoped, tag = 'output window, operand 0, single buffered']
    %10 = vsyncpa [#allocation4], 0
    %11 = vsyncpa [#allocation7], 0
    %12 = vsyncpa [#allocation5], 0
    // Predicated region
    $region2: #{tpu_custom_call.1} parent=1 // pred_check
      _
    $region3: #{tpu_custom_call.1} parent=1 // pred_check_branch
      %14 = sbr.rel (0) target = $region5
    $region4: #{tpu_custom_call.1} parent=1 // pred_region
      %s16 = ssub.s32 256, 256
      %17 = vsyncadd [#allocation4], %s16
      %s18 = sshll.u32 [#allocation3], 4
      %s19 = int_to_ptr.vmem [resolvable:$true] %s18
      %24 = dma.hbm_to_vmem [thread:$0]  %s0, 256, %s19, [#allocation4], 128, 128, 8
    $region5: #{tpu_custom_call.1} parent=1 // pred_fallthru
      _
    // Predicated region
    $region6: #{tpu_custom_call.1} parent=1 // pred_check
      _
    $region7: #{tpu_custom_call.1} parent=1 // pred_check_branch
      %26 = sbr.rel (0) target = $region9
    $region8: #{tpu_custom_call.1} parent=1 // pred_region
      %s28 = ssub.s32 64, 64
      %29 = vsyncadd [#allocation7], %s28
      %s31 = sshll.u32 [#allocation6], 4
      %s32 = int_to_ptr.vmem [resolvable:$true] %s31
      %34 = dma.hbm_to_vmem [thread:$0]  %s1, 64, %s32, [#allocation7]
    $region9: #{tpu_custom_call.1} parent=1 // pred_fallthru
      _
    // Predicated region
    $region10: #{tpu_custom_call.1} parent=1 // pred_check
      _
    $region11: #{tpu_custom_call.1} parent=1 // pred_check_branch
      %36 = sbr.rel (0) target = $region13
    $region12: #{tpu_custom_call.1} parent=1 // pred_region
      _
    $region13: #{tpu_custom_call.1} parent=1 // pred_fallthru
      _
    // Predicated region
    $region14: #{tpu_custom_call.1} parent=1 // pred_check
      _
    $region15: #{tpu_custom_call.1} parent=1 // pred_check_branch
      %38 = sbr.rel (0) target = $region17
    $region16: #{tpu_custom_call.1} parent=1 // pred_region
      %s40 = ssub.s32 2048, 2048
      %41 = vsyncadd [#allocation7], %s40
      %s42 = sshll.u32 [#allocation8], 4
      %s43 = int_to_ptr.vmem [resolvable:$true] %s42
      %48 = dma.hbm_to_vmem [thread:$0]  %s3, 2048, %s43, [#allocation7], 128, 128, 8
    $region17: #{tpu_custom_call.1} parent=1 // pred_fallthru
      _
    // Predicated region
    $region18: #{tpu_custom_call.1} parent=1 // pred_check
      _
    $region19: #{tpu_custom_call.1} parent=1 // pred_check_branch
      %50 = sbr.rel (0) target = $region21
    $region20: #{tpu_custom_call.1} parent=1 // pred_region
      _
    $region21: #{tpu_custom_call.1} parent=1 // pred_fallthru
      _
    // Predicated region
    $region22: #{tpu_custom_call.1} parent=1 // pred_check
      _
    $region23: #{tpu_custom_call.1} parent=1 // pred_check_branch
      %52 = sbr.rel (0) target = $region25
    $region24: #{tpu_custom_call.1} parent=1 // pred_region
      %53 = dma.done [#allocation4], 256
    $region25: #{tpu_custom_call.1} parent=1 // pred_fallthru
      _
    // Predicated region
    $region26: #{tpu_custom_call.1} parent=1 // pred_check
      _
    $region27: #{tpu_custom_call.1} parent=1 // pred_check_branch
      %55 = sbr.rel (0) target = $region29
    $region28: #{tpu_custom_call.1} parent=1 // pred_region
      %56 = dma.done [#allocation7], 64
    $region29: #{tpu_custom_call.1} parent=1 // pred_fallthru
      _
    // Predicated region
    $region30: #{tpu_custom_call.1} parent=1 // pred_check
      _
    $region31: #{tpu_custom_call.1} parent=1 // pred_check_branch
      %58 = sbr.rel (0) target = $region33
    $region32: #{tpu_custom_call.1} parent=1 // pred_region
      %59 = dma.done [#allocation7], 2048
    $region33: #{tpu_custom_call.1} parent=1 // pred_fallthru
      _
    %p60 = scmp.eq.s32.totalorder 0, 0
    // Predicated region
    $region34: #{tpu_custom_call.1} parent=1 // pred_check
      %p61 = pneg %p60
    $region35: #{tpu_custom_call.1} parent=1 // pred_check_branch
      %63 = sbr.rel (%p61) target = $region37
    $region36: #{tpu_custom_call.1} parent=1 // pred_region
      %64 = vst [vmem:[#allocation2] sm:$0x3] 0.0
    $region37: #{tpu_custom_call.1} parent=1 // pred_fallthru
      _
    %v65 = vld [vmem:[#allocation3] sm:$0xff]
    %v66 = vld [vmem:[#allocation3 + $0x8] sm:$0xff]
    %v69 = vcombine.high %v65, %v65
    %v70 = vcombine.high %v66, %v66
    %vm73 = vcmask 1043456
    %v74 = vsel %vm73, %v65, 0.0
    %v75 = vsel %vm73, %v69, 0.0
    %v76 = vadd.f32 %v74, %v75
    %77 = vadd.xlane.f32.xlu0 %v76
    %v78 = vpop.xlane.xlu0 %77
    %v79 = vsel %vm73, %v66, 0.0
    %v80 = vsel %vm73, %v70, 0.0
    %v81 = vadd.f32 %v79, %v80
    %82 = vadd.xlane.f32.xlu0 %v81
    %v83 = vpop.xlane.xlu0 %82
    %v84 = vrcp.pop 256.0
    %v85 = vmul.f32 %v78, %v84
    %v86 = vmul.f32 %v83, %v84
    %v87 = vld [vmem:[#allocation2] sm:$0x3]
    %v88 = vld [vmem:[#allocation6] sm:$0xf]
    %v91 = vlaneseq
    %v92 = vand.u32 %v91, 127
    %v93 = vlaneseq
    %v94 = vshrl.u32 %v93, 7
    %v95 = vsub.s32 %v92, %v94
    %v96 = vrot.slane %v85, %v95
    %v97 = vlaneseq
    %v98 = vshrl.u32 %v97, 7
    %v99 = vsub.s32 %v92, %v98
    %v100 = vrot.slane %v86, %v99
    %vm101 = vcmask 1041409
    %v102 = vsel %vm101, %v100, %v96
    %vm103 = vcmask 31744
    %v104 = vsel %vm103, %v102, 0
    %v107 = vsel %vm73, %v88, 0
    %109 = vmatprep.subr.mxu0 0.0
    %110 = vmatpush1.msra.mxu0 0.0
    %111 = vmatprep.subr.mxu0 0.0
    %112 = vmatpush1.msra.mxu0 0.0
    %113 = vmatprep.subr.mxu0 0.0
    %114 = vmatpush1.msra.mxu0 0.0
    %115 = vmatprep.subr.mxu0 0.0
    %116 = vmatpush1.msra.mxu0 0.0
    %117 = vmatprep.subr.mxu0 0.0
    %118 = vmatpush1.msra.mxu0 0.0
    %119 = vmatprep.subr.mxu0 0.0
    %120 = vmatpush1.msra.mxu0 0.0
    %121 = vmatprep.subr.mxu0 0.0
    %122 = vmatpush1.msra.mxu0 0.0
    %123 = vmatprep.subr.mxu0 0.0
    %124 = vmatpush1.msra.mxu0 0.0
    %125 = vmatprep.subr.mxu0 0.0
    %126 = vmatpush1.msra.mxu0 0.0
    %127 = vmatprep.subr.mxu0 0.0
    %128 = vmatpush1.msra.mxu0 0.0
    %129 = vmatprep.subr.mxu0 0.0
    %130 = vmatpush1.msra.mxu0 0.0
    %131 = vmatprep.subr.mxu0 0.0
    %132 = vmatpush1.msra.mxu0 0.0
    %133 = vmatprep.subr.mxu0 0.0
    %134 = vmatpush1.msra.mxu0 0.0
    %135 = vmatprep.subr.mxu0 0.0
    %136 = vmatpush1.msra.mxu0 0.0
    %137 = vmatprep.subr.mxu0 0.0
    %138 = vmatpush1.msra.mxu0 0.0
    %139 = vmatprep.subr.mxu0 0.0
    %140 = vmatpush1.msra.mxu0 %v107
    %141 = vmatprep.subr.mxu0 0.0
    %142 = vmatpush2.msra.mxu0 0.0
    %143 = vmatprep.subr.mxu0 0.0
    %144 = vmatpush2.msra.mxu0 0.0
    %145 = vmatprep.subr.mxu0 0.0
    %146 = vmatpush2.msra.mxu0 0.0
    %147 = vmatprep.subr.mxu0 0.0
    %148 = vmatpush2.msra.mxu0 0.0
    %149 = vmatprep.subr.mxu0 0.0
    %150 = vmatpush2.msra.mxu0 0.0
    %151 = vmatprep.subr.mxu0 0.0
    %152 = vmatpush2.msra.mxu0 0.0
    %153 = vmatprep.subr.mxu0 0.0
    %154 = vmatpush2.msra.mxu0 0.0
    %155 = vmatprep.subr.mxu0 0.0
    %156 = vmatpush2.msra.mxu0 0.0
    %157 = vmatprep.subr.mxu0 0.0
    %158 = vmatpush2.msra.mxu0 0.0
    %159 = vmatprep.subr.mxu0 0.0
    %160 = vmatpush2.msra.mxu0 0.0
    %161 = vmatprep.subr.mxu0 0.0
    %162 = vmatpush2.msra.mxu0 0.0
    %163 = vmatprep.subr.mxu0 0.0
    %164 = vmatpush2.msra.mxu0 0.0
    %165 = vmatprep.subr.mxu0 0.0
    %166 = vmatpush2.msra.mxu0 0.0
    %167 = vmatprep.subr.mxu0 0.0
    %168 = vmatpush2.msra.mxu0 0.0
    %169 = vmatprep.subr.mxu0 0.0
    %170 = vmatpush2.msra.mxu0 0.0
    %171 = vmatprep.subr.mxu0 0.0
    %172 = vmatpush2.msra.mxu0 0.0
    %173 = vmatprep.mubr.f32.mxu0 0.0
    %174 = vmatmul.mubr.f32.gmra.mxu0 %v104
    %v175 = vpop.f32.mrf.mxu0
    %v176 = vadd.f32 0.0, %v175
    %v177 = vpop.f32.mrf.mxu0
    %178 = vdwg.mxu0
    %v179 = vadd.f32 %v87, %v176
    %180 = vst [vmem:[#allocation2] sm:$0x3] %v179
    // Predicated region
    $region38: #{tpu_custom_call.1} parent=1 // pred_check
      %p181 = pneg %p60
    $region39: #{tpu_custom_call.1} parent=1 // pred_check_branch
      %183 = sbr.rel (%p181) target = $region41
    $region40: #{tpu_custom_call.1} parent=1 // pred_region
      %v184 = vld [vmem:[#allocation2] sm:$0x3]
      %v185 = vld [vmem:[%s2] sm:$0x1]
      %v187 = vlaneseq
      %v188 = vshrl.u32 %v187, 7
      %v189 = vsub.s32 0, %v188
      %v190 = vrot.slane %v185, %v189
      %v192 = vadd.f32 %v184, %v190
      %v193 = vmax.f32 %v192, 0.0
      %v194 = vld [vmem:[#allocation8] sm:$0xff]
      %v195 = vld [vmem:[#allocation8 + $0x8] sm:$0xff]
      %v196 = vld [vmem:[#allocation8 + $0x10] sm:$0xff]
      %v197 = vld [vmem:[#allocation8 + $0x18] sm:$0xff]
      %v198 = vld [vmem:[#allocation8 + $0x20] sm:$0xff]
      %v199 = vld [vmem:[#allocation8 + $0x28] sm:$0xff]
      %v200 = vld [vmem:[#allocation8 + $0x30] sm:$0xff]
      %v201 = vld [vmem:[#allocation8 + $0x38] sm:$0xff]
      %v202 = vld [vmem:[#allocation8 + $0x40] sm:$0xff]
      %v203 = vld [vmem:[#allocation8 + $0x48] sm:$0xff]
      %v204 = vld [vmem:[#allocation8 + $0x50] sm:$0xff]
      %v205 = vld [vmem:[#allocation8 + $0x58] sm:$0xff]
      %v206 = vld [vmem:[#allocation8 + $0x60] sm:$0xff]
      %v207 = vld [vmem:[#allocation8 + $0x68] sm:$0xff]
      %v208 = vld [vmem:[#allocation8 + $0x70] sm:$0xff]
      %v209 = vld [vmem:[#allocation8 + $0x78] sm:$0xff]
      %v210 = vld [vmem:[%s4] sm:$0x1]
      %v212 = vlaneseq
      %v213 = vshrl.u32 %v212, 7
      %v214 = vsub.s32 0, %v213
      %v215 = vrot.slane %v210, %v214
      %217 = vmatprep.subr.mxu0 0.0
      %218 = vmatpush1.msra.mxu0 %v209
      %219 = vmatprep.subr.mxu0 0.0
      %220 = vmatpush1.msra.mxu0 %v208
      %221 = vmatprep.subr.mxu0 0.0
      %222 = vmatpush1.msra.mxu0 %v207
      %223 = vmatprep.subr.mxu0 0.0
      %224 = vmatpush1.msra.mxu0 %v206
      %225 = vmatprep.subr.mxu0 0.0
      %226 = vmatpush1.msra.mxu0 %v205
      %227 = vmatprep.subr.mxu0 0.0
      %228 = vmatpush1.msra.mxu0 %v204
      %229 = vmatprep.subr.mxu0 0.0
      %230 = vmatpush1.msra.mxu0 %v203
      %231 = vmatprep.subr.mxu0 0.0
      %232 = vmatpush1.msra.mxu0 %v202
      %233 = vmatprep.subr.mxu0 0.0
      %234 = vmatpush1.msra.mxu0 %v201
      %235 = vmatprep.subr.mxu0 0.0
      %236 = vmatpush1.msra.mxu0 %v200
      %237 = vmatprep.subr.mxu0 0.0
      %238 = vmatpush1.msra.mxu0 %v199
      %239 = vmatprep.subr.mxu0 0.0
      %240 = vmatpush1.msra.mxu0 %v198
      %241 = vmatprep.subr.mxu0 0.0
      %242 = vmatpush1.msra.mxu0 %v197
      %243 = vmatprep.subr.mxu0 0.0
      %244 = vmatpush1.msra.mxu0 %v196
      %245 = vmatprep.subr.mxu0 0.0
      %246 = vmatpush1.msra.mxu0 %v195
      %247 = vmatprep.subr.mxu0 0.0
      %248 = vmatpush1.msra.mxu0 %v194
      %249 = vmatprep.subr.mxu0 0.0
      %250 = vmatpush2.msra.mxu0 0.0
      %251 = vmatprep.subr.mxu0 0.0
      %252 = vmatpush2.msra.mxu0 0.0
      %253 = vmatprep.subr.mxu0 0.0
      %254 = vmatpush2.msra.mxu0 0.0
      %255 = vmatprep.subr.mxu0 0.0
      %256 = vmatpush2.msra.mxu0 0.0
      %257 = vmatprep.subr.mxu0 0.0
      %258 = vmatpush2.msra.mxu0 0.0
      %259 = vmatprep.subr.mxu0 0.0
      %260 = vmatpush2.msra.mxu0 0.0
      %261 = vmatprep.subr.mxu0 0.0
      %262 = vmatpush2.msra.mxu0 0.0
      %263 = vmatprep.subr.mxu0 0.0
      %264 = vmatpush2.msra.mxu0 0.0
      %265 = vmatprep.subr.mxu0 0.0
      %266 = vmatpush2.msra.mxu0 0.0
      %267 = vmatprep.subr.mxu0 0.0
      %268 = vmatpush2.msra.mxu0 0.0
      %269 = vmatprep.subr.mxu0 0.0
      %270 = vmatpush2.msra.mxu0 0.0
      %271 = vmatprep.subr.mxu0 0.0
      %272 = vmatpush2.msra.mxu0 0.0
      %273 = vmatprep.subr.mxu0 0.0
      %274 = vmatpush2.msra.mxu0 0.0
      %275 = vmatprep.subr.mxu0 0.0
      %276 = vmatpush2.msra.mxu0 0.0
      %277 = vmatprep.subr.mxu0 0.0
      %278 = vmatpush2.msra.mxu0 0.0
      %279 = vmatprep.subr.mxu0 0.0
      %280 = vmatpush2.msra.mxu0 0.0
      %281 = vmatprep.mubr.f32.mxu0 0.0
      %282 = vmatmul.mubr.f32.gmra.mxu0 %v193
      %v283 = vpop.f32.mrf.mxu0
      %v284 = vadd.f32 %v215, %v283
      %v285 = vpop.f32.mrf.mxu0
      %286 = vdwg.mxu0
      %287 = vst [vmem:[#allocation9] sm:$0x3] %v284
    $region41: #{tpu_custom_call.1} parent=1 // pred_fallthru
      _
    // Predicated region
    $region42: #{tpu_custom_call.1} parent=1 // pred_check
      _
    $region43: #{tpu_custom_call.1} parent=1 // pred_check_branch
      %289 = sbr.rel (0) target = $region45
    $region44: #{tpu_custom_call.1} parent=1 // pred_region
      %s291 = ssub.s32 32, 32
      %292 = vsyncadd [#allocation5], %s291
      %s294 = sshll.u32 [#allocation9], 4
      %s295 = int_to_ptr.vmem [resolvable:$true] %s294
      %297 = dma.vmem_to_hbm [thread:$0]  %s295, 32, %s5, [#allocation5]
    $region45: #{tpu_custom_call.1} parent=1 // pred_fallthru
      _
    // Predicated region
    $region46: #{tpu_custom_call.1} parent=1 // pred_check
      _
    $region47: #{tpu_custom_call.1} parent=1 // pred_check_branch
      %299 = sbr.rel (0) target = $region49
    $region48: #{tpu_custom_call.1} parent=1 // pred_region
      %300 = dma.done [#allocation5], 32
    $region49: #{tpu_custom_call.1} parent=1 // pred_fallthru
      _
    %301 = vsyncpa [#allocation4], 1
    %302 = vsyncpa [#allocation7], 1
    %303 = vsyncpa [#allocation5], 1

</llo_original>
